<compile_context>
chip_gen: v7x
topology: tpu7x:2x2x1
jax: 0.10.0
libtpu: 0.0.40
codegen_flags: <defaults>
</compile_context>

<pallas_src>
import jax
import jax.numpy as jnp
from jax import lax
from jax.experimental import pallas as pl
from jax.experimental.pallas import tpu as pltpu


# -----------------------------------------------------------------------------
# Phase 1: Z_new for ALL relations at once (linear in N, no N x N temporaries).
# All relation weights are pre-packed and zero-padded to k_pad (multiple of
# 128) in the wrapper, so every matmul here is wide/lane-dense and the output's
# pad columns are exactly zero.
# -----------------------------------------------------------------------------
def znew_kernel(z_ref, x_ref, w1_ref, w2_ref, w3_ref, e_ref, out_ref):
    Z = z_ref[...].astype(jnp.float32)          # [N, Zd]
    X = x_ref[...].astype(jnp.float32)          # [N, Xd]
    W1 = w1_ref[...]                            # [Zd, k_pad]
    W2 = w2_ref[...]                            # [Xd, k_pad]
    W3 = w3_ref[...]                            # [k_pad, k_pad] (block diag)
    E = e_ref[...]                              # [Zd, k_pad]  (R identities)

    # recon_1 = Z / ||Z||_2 row-wise via rsqrt (EUP) + multiply.  Zero-norm
    # rows give NaN, matching the PyTorch 0/0 behavior.
    inv_norm = lax.rsqrt(jnp.sum(Z * Z, axis=1, keepdims=True))
    recon1 = Z * inv_norm                        # [N, Zd]

    def apply_A(H):
        # A @ H == recon1 @ (recon1.T @ H) + ones(N,1) * column_sum(H)
        proj = lax.dot_general(
            recon1, H,
            dimension_numbers=(((0,), (0,)), ((), ())),
            preferred_element_type=jnp.float32)          # [Zd, k_pad]
        low_rank = jnp.dot(recon1, proj, preferred_element_type=jnp.float32)
        return low_rank + jnp.sum(H, axis=0, keepdims=True)

    H1 = jnp.dot(Z, W1, preferred_element_type=jnp.float32)   # [N, k_pad]
    H2 = jnp.dot(X, W2, preferred_element_type=jnp.float32)   # [N, k_pad]
    Z1 = jnp.maximum(apply_A(H1), 0.0) + jnp.maximum(apply_A(H2), 0.0)
    H3 = jnp.dot(Z1, W3, preferred_element_type=jnp.float32)  # [N, k_pad]
    Z2 = apply_A(H3)

    # Z @ E replicates Z into every relation's column block (pad cols stay 0).
    ZN = 0.5 * (jnp.dot(Z, E, preferred_element_type=jnp.float32) + Z2)
    out_ref[...] = ZN.astype(out_ref.dtype)


# -----------------------------------------------------------------------------
# Phase 2: tiled gram  out = ZNcat @ ZNcat.T  (the only N x N object).
# -----------------------------------------------------------------------------
def gram_kernel(a_ref, b_ref, o_ref):
    # NT-form dot_general: contract axis 1 of both operands (no XLU transpose).
    o_ref[...] = lax.dot_general(
        a_ref[...], b_ref[...],
        dimension_numbers=(((1,), (1,)), ((), ())),
        preferred_element_type=jnp.float32).astype(o_ref.dtype)


# -----------------------------------------------------------------------------
# Wrapper
# -----------------------------------------------------------------------------
def _round_up(v, m):
    return ((v + m - 1) // m) * m


def multi_latent_graphit(Z, X, W1, W2, W3, *, max_tile=1024,
                         gram_dtype=jnp.float32):
    """Forward of MultiLatentLayerGraphit.

    W1: [R, Zd, Zd], W2: [R, Xd, Zd], W3: [R, Zd, Zd].  Returns [N, N] f32.
    """
    N, z_dim = Z.shape
    x_dim = X.shape[1]
    num_rel = W1.shape[0]
    K = num_rel * z_dim
    k_pad = _round_up(K, 128)
    pad_k = k_pad - K
    f32 = jnp.float32

    # ---- tiny per-relation weight packing (outside the kernels, done once) --
    W1cat = jnp.pad(jnp.transpose(W1, (1, 0, 2)).reshape(z_dim, K).astype(f32),
                    ((0, 0), (0, pad_k)))
    W2cat = jnp.pad(jnp.transpose(W2, (1, 0, 2)).reshape(x_dim, K).astype(f32),
                    ((0, 0), (0, pad_k)))
    W3blk = jax.scipy.linalg.block_diag(*[W3[r].astype(f32)
                                          for r in range(num_rel)])
    W3blk = jnp.pad(W3blk, ((0, pad_k), (0, pad_k)))
    E = jnp.pad(jnp.tile(jnp.eye(z_dim, dtype=f32), (1, num_rel)),
                ((0, 0), (0, pad_k)))

    # ---- phase 1: Z_new for all relations, lane-dense [N, k_pad] ------------
    vmem = pl.BlockSpec(memory_space=pltpu.MemorySpace.VMEM)
    est1 = 4 * (N * (z_dim + x_dim + 8 * k_pad)
                + 2 * z_dim * k_pad + x_dim * k_pad + k_pad * k_pad)
    vmem1 = int(min(max(est1 + (2 << 20), 16 << 20), 40 << 20))
    # TODO(synk): for very large N, phase 1 should be tiled over N with a
    #             two-pass structure (accumulate recon1.T@H and colsum(H) over
    #             N-tiles, then a per-tile pass) instead of whole-array VMEM
    #             residency.
    zn = pl.pallas_call(
        znew_kernel,
        out_shape=jax.ShapeDtypeStruct((N, k_pad), gram_dtype),
        in_specs=[vmem] * 6,
        out_specs=vmem,
        compiler_params=pltpu.CompilerParams(vmem_limit_bytes=vmem1),
    )(Z, X, W1cat, W2cat, W3blk, E)

    # ---- phase 2: tiled lane-dense gram, output written directly as (N, N) --
    in_bytes = jnp.dtype(gram_dtype).itemsize
    tile = 128
    for cand in (1024, 512, 256, 128):
        if cand > max_tile:
            continue
        need = 2 * 2 * cand * k_pad * in_bytes + 2 * cand * cand * 4
        if need <= (28 << 20):       # fits comfortably on v5e/v6e/v7x budgets
            tile = cand
            break

    gm = pl.cdiv(N, tile)
    if gm == 1:
        blk_in, blk_out = (N, k_pad), (N, N)           # full-array blocks
    else:
        blk_in, blk_out = (tile, k_pad), (tile, tile)  # ragged edges masked

    need2 = (2 * 2 * blk_in[0] * blk_in[1] * in_bytes
             + 2 * blk_out[0] * blk_out[1] * 4)
    vmem2 = int(min(max(need2 + (2 << 20), 8 << 20), 40 << 20))

    out = pl.pallas_call(
        gram_kernel,
        out_shape=jax.ShapeDtypeStruct((N, N), jnp.float32),
        grid_spec=pltpu.PrefetchScalarGridSpec(
            num_scalar_prefetch=0,
            grid=(gm, gm),
            in_specs=[
                pl.BlockSpec(blk_in, lambda i, j: (i, 0)),
                pl.BlockSpec(blk_in, lambda i, j: (j, 0)),
            ],
            out_specs=pl.BlockSpec(blk_out, lambda i, j: (i, j)),
        ),
        compiler_params=pltpu.CompilerParams(
            dimension_semantics=("parallel", "parallel"),
            vmem_limit_bytes=vmem2,
        ),
    )(zn, zn)
    return out


# -----------------------------------------------------------------------------
# Pure-JAX reference mirroring the PyTorch forward exactly
# -----------------------------------------------------------------------------
def _reference(Z, X, W1, W2, W3):
    outs = []
    for r in range(W1.shape[0]):
        recon_1 = Z / jnp.linalg.norm(Z, axis=1, keepdims=True)
        recon_2 = jnp.ones_like(recon_1)
        recon_2 = recon_2 / jnp.sqrt(jnp.sum(recon_2, axis=1, keepdims=True))
        A = recon_1 @ recon_1.T + recon_2 @ recon_2.T
        Z1 = jax.nn.relu(A @ (Z @ W1[r])) + jax.nn.relu(A @ (X @ W2[r]))
        Z2 = A @ (Z1 @ W3[r])
        Zn = 0.5 * Z + 0.5 * Z2
        outs.append(Zn @ Zn.T)
    return sum(outs)


if __name__ == "__main__":
    def glorot(k, shape):
        fan_in, fan_out = shape[-2], shape[-1]
        scale = jnp.sqrt(6.0 / (fan_in + fan_out))
        return jax.random.uniform(k, shape, jnp.float32, -scale, scale)

    def make_inputs(key, n, x_dim, z_dim, r):
        kz, kx, k1, k2, k3 = jax.random.split(key, 5)
        Z = jax.random.normal(kz, (n, z_dim), dtype=jnp.float32)
        X = jax.random.normal(kx, (n, x_dim), dtype=jnp.float32)
        W1 = glorot(k1, (r, z_dim, z_dim))
        W2 = glorot(k2, (r, x_dim, z_dim))
        W3 = glorot(k3, (r, z_dim, z_dim))
        return Z, X, W1, W2, W3

    key = jax.random.PRNGKey(0)
    k_small, k_big = jax.random.split(key)

    # Small case (single-block gram), strict check against the f32 reference.
    N, X_dim, Z_dim, R = 8, 16, 32, 2
    Z, X, W1, W2, W3 = make_inputs(k_small, N, X_dim, Z_dim, R)
    out = jax.block_until_ready(multi_latent_graphit(Z, X, W1, W2, W3))
    ref = _reference(Z, X, W1, W2, W3)
    assert out.shape == (N, N)
    assert jnp.allclose(out, ref, rtol=1e-4, atol=1e-3), "small-case mismatch"

    # Medium case forcing a 2x2 grid with ragged edge blocks (N % tile != 0),
    # checked with a scale-relative tolerance (validates masking/structure).
    N2, Xd2, Zd2, R2 = 200, 16, 32, 3
    Zb, Xb, W1b, W2b, W3b = make_inputs(k_big, N2, Xd2, Zd2, R2)
    out2 = jax.block_until_ready(
        multi_latent_graphit(Zb, Xb, W1b, W2b, W3b, max_tile=128))
    ref2 = _reference(Zb, Xb, W1b, W2b, W3b)
    assert out2.shape == (N2, N2)
    scale = jnp.max(jnp.abs(ref2))
    err = jnp.max(jnp.abs(out2 - ref2))
    assert bool(err <= 5e-3 * scale + 1e-2), "ragged-grid case mismatch"

    print("KERNEL_OK")
</pallas_src>

<mosaic_0001>
module attributes {stable_mosaic.version = 11 : i64} {
  func.func @znew_kernel(%arg0: memref<8x32xf32, #tpu.memory_space<vmem>>, %arg1: memref<8x16xf32, #tpu.memory_space<vmem>>, %arg2: memref<32x128xf32, #tpu.memory_space<vmem>>, %arg3: memref<16x128xf32, #tpu.memory_space<vmem>>, %arg4: memref<128x128xf32, #tpu.memory_space<vmem>>, %arg5: memref<32x128xf32, #tpu.memory_space<vmem>>, %arg6: memref<8x128xf32, #tpu.memory_space<vmem>>) attributes {dimension_semantics = [], scalar_prefetch = 0 : i64, scratch_operands = 0 : i64, tpu.core_type = #tpu.core_type<tc>} {
    %c0 = arith.constant 0 : index
    %c0_0 = arith.constant 0 : index
    %0 = vector.load %arg0[%c0, %c0_0] : memref<8x32xf32, #tpu.memory_space<vmem>>, vector<8x32xf32>
    %c0_1 = arith.constant 0 : index
    %c0_2 = arith.constant 0 : index
    %1 = vector.load %arg1[%c0_1, %c0_2] : memref<8x16xf32, #tpu.memory_space<vmem>>, vector<8x16xf32>
    %c0_3 = arith.constant 0 : index
    %c0_4 = arith.constant 0 : index
    %2 = vector.load %arg2[%c0_3, %c0_4] : memref<32x128xf32, #tpu.memory_space<vmem>>, vector<32x128xf32>
    %c0_5 = arith.constant 0 : index
    %c0_6 = arith.constant 0 : index
    %3 = vector.load %arg3[%c0_5, %c0_6] : memref<16x128xf32, #tpu.memory_space<vmem>>, vector<16x128xf32>
    %c0_7 = arith.constant 0 : index
    %c0_8 = arith.constant 0 : index
    %4 = vector.load %arg4[%c0_7, %c0_8] : memref<128x128xf32, #tpu.memory_space<vmem>>, vector<128x128xf32>
    %c0_9 = arith.constant 0 : index
    %c0_10 = arith.constant 0 : index
    %5 = vector.load %arg5[%c0_9, %c0_10] : memref<32x128xf32, #tpu.memory_space<vmem>>, vector<32x128xf32>
    %6 = arith.mulf %0, %0 : vector<8x32xf32>
    %cst = arith.constant dense<0.000000e+00> : vector<8xf32>
    %7 = vector.multi_reduction <add>, %6, %cst [1] : vector<8x32xf32> to vector<8xf32>
    %8 = vector.shape_cast %7 : vector<8xf32> to vector<8x1xf32>
    %9 = math.rsqrt %8 : vector<8x1xf32>
    %10 = vector.broadcast %9 : vector<8x1xf32> to vector<8x32xf32>
    %11 = arith.mulf %0, %10 : vector<8x32xf32>
    %cst_11 = arith.constant dense<0.000000e+00> : vector<8x128xf32>
    %12 = tpu.matmul %0, %2, %cst_11 {dimension_numbers = #tpu.dot_dimension_numbers<[1], [0], [0], [1], [0, 0, 1, 1], [], []>} : vector<8x32xf32>, vector<32x128xf32>, vector<8x128xf32> -> vector<8x128xf32>
    %cst_12 = arith.constant dense<0.000000e+00> : vector<8x128xf32>
    %13 = tpu.matmul %1, %3, %cst_12 {dimension_numbers = #tpu.dot_dimension_numbers<[1], [0], [0], [1], [0, 0, 1, 1], [], []>} : vector<8x16xf32>, vector<16x128xf32>, vector<8x128xf32> -> vector<8x128xf32>
    %cst_13 = arith.constant dense<0.000000e+00> : vector<32x128xf32>
    %14 = tpu.matmul %11, %12, %cst_13 {dimension_numbers = #tpu.dot_dimension_numbers<[0], [0], [1], [1], [0, 1, 1, 1], [], []>} : vector<8x32xf32>, vector<8x128xf32>, vector<32x128xf32> -> vector<32x128xf32>
    %cst_14 = arith.constant dense<0.000000e+00> : vector<8x128xf32>
    %15 = tpu.matmul %11, %14, %cst_14 {dimension_numbers = #tpu.dot_dimension_numbers<[1], [0], [0], [1], [0, 0, 1, 1], [], []>} : vector<8x32xf32>, vector<32x128xf32>, vector<8x128xf32> -> vector<8x128xf32>
    %cst_15 = arith.constant dense<0.000000e+00> : vector<128xf32>
    %16 = vector.multi_reduction <add>, %12, %cst_15 [0] : vector<8x128xf32> to vector<128xf32>
    %17 = vector.shape_cast %16 : vector<128xf32> to vector<1x128xf32>
    %18 = vector.broadcast %17 : vector<1x128xf32> to vector<8x128xf32>
    %19 = arith.addf %15, %18 : vector<8x128xf32>
    %cst_16 = arith.constant 0.000000e+00 : f32
    %20 = vector.broadcast %cst_16 : f32 to vector<8x128xf32>
    %21 = arith.maximumf %19, %20 : vector<8x128xf32>
    %cst_17 = arith.constant dense<0.000000e+00> : vector<32x128xf32>
    %22 = tpu.matmul %11, %13, %cst_17 {dimension_numbers = #tpu.dot_dimension_numbers<[0], [0], [1], [1], [0, 1, 1, 1], [], []>} : vector<8x32xf32>, vector<8x128xf32>, vector<32x128xf32> -> vector<32x128xf32>
    %cst_18 = arith.constant dense<0.000000e+00> : vector<8x128xf32>
    %23 = tpu.matmul %11, %22, %cst_18 {dimension_numbers = #tpu.dot_dimension_numbers<[1], [0], [0], [1], [0, 0, 1, 1], [], []>} : vector<8x32xf32>, vector<32x128xf32>, vector<8x128xf32> -> vector<8x128xf32>
    %cst_19 = arith.constant dense<0.000000e+00> : vector<128xf32>
    %24 = vector.multi_reduction <add>, %13, %cst_19 [0] : vector<8x128xf32> to vector<128xf32>
    %25 = vector.shape_cast %24 : vector<128xf32> to vector<1x128xf32>
    %26 = vector.broadcast %25 : vector<1x128xf32> to vector<8x128xf32>
    %27 = arith.addf %23, %26 : vector<8x128xf32>
    %cst_20 = arith.constant 0.000000e+00 : f32
    %28 = vector.broadcast %cst_20 : f32 to vector<8x128xf32>
    %29 = arith.maximumf %27, %28 : vector<8x128xf32>
    %30 = arith.addf %21, %29 : vector<8x128xf32>
    %cst_21 = arith.constant dense<0.000000e+00> : vector<8x128xf32>
    %31 = tpu.matmul %30, %4, %cst_21 {dimension_numbers = #tpu.dot_dimension_numbers<[1], [0], [0], [1], [0, 0, 1, 1], [], []>} : vector<8x128xf32>, vector<128x128xf32>, vector<8x128xf32> -> vector<8x128xf32>
    %cst_22 = arith.constant dense<0.000000e+00> : vector<32x128xf32>
    %32 = tpu.matmul %11, %31, %cst_22 {dimension_numbers = #tpu.dot_dimension_numbers<[0], [0], [1], [1], [0, 1, 1, 1], [], []>} : vector<8x32xf32>, vector<8x128xf32>, vector<32x128xf32> -> vector<32x128xf32>
    %cst_23 = arith.constant dense<0.000000e+00> : vector<8x128xf32>
    %33 = tpu.matmul %11, %32, %cst_23 {dimension_numbers = #tpu.dot_dimension_numbers<[1], [0], [0], [1], [0, 0, 1, 1], [], []>} : vector<8x32xf32>, vector<32x128xf32>, vector<8x128xf32> -> vector<8x128xf32>
    %cst_24 = arith.constant dense<0.000000e+00> : vector<128xf32>
    %34 = vector.multi_reduction <add>, %31, %cst_24 [0] : vector<8x128xf32> to vector<128xf32>
    %35 = vector.shape_cast %34 : vector<128xf32> to vector<1x128xf32>
    %36 = vector.broadcast %35 : vector<1x128xf32> to vector<8x128xf32>
    %37 = arith.addf %33, %36 : vector<8x128xf32>
    %cst_25 = arith.constant dense<0.000000e+00> : vector<8x128xf32>
    %38 = tpu.matmul %0, %5, %cst_25 {dimension_numbers = #tpu.dot_dimension_numbers<[1], [0], [0], [1], [0, 0, 1, 1], [], []>} : vector<8x32xf32>, vector<32x128xf32>, vector<8x128xf32> -> vector<8x128xf32>
    %39 = arith.addf %38, %37 : vector<8x128xf32>
    %cst_26 = arith.constant 5.000000e-01 : f32
    %40 = vector.broadcast %cst_26 : f32 to vector<8x128xf32>
    %41 = arith.mulf %40, %39 : vector<8x128xf32>
    %c0_27 = arith.constant 0 : index
    %c0_28 = arith.constant 0 : index
    %42 = vector.load %arg6[%c0_27, %c0_28] : memref<8x128xf32, #tpu.memory_space<vmem>>, vector<8x128xf32>
    tpu.vector_store %arg6[%c0_27, %c0_28], %41 {strides = array<i32>} : memref<8x128xf32, #tpu.memory_space<vmem>>, vector<8x128xf32>,
    return
  }
}

</mosaic_0001>

<llo_original>
// kernel: tpu_custom_call.1
$region0: #{tpu_custom_call.1}
  #allocation0 [shape = 'u32[]', space=smem, size = 0x4, offset = 0x4, fixed_abs, tag = 'smem constant byte address 0x4 - core index']
  #allocation1 [shape = 'u32[144,128]{1,0:T(1,128)}', space=vmem, size = 0x12000, scoped, tag = 'internal scratch']
  %s0 = inlined_call_operand.hbm [shape: f32[8,32], index: 0, kind: input, shape index: {}]
  %s1 = inlined_call_operand.hbm [shape: f32[8,16], index: 1, kind: input, shape index: {}]
  %s2 = inlined_call_operand.hbm [shape: f32[32,128], index: 2, kind: input, shape index: {}]
  %s3 = inlined_call_operand.hbm [shape: f32[16,128], index: 3, kind: input, shape index: {}]
  %s4 = inlined_call_operand.hbm [shape: f32[128,128], index: 4, kind: input, shape index: {}]
  %s5 = inlined_call_operand.hbm [shape: f32[32,128], index: 5, kind: input, shape index: {}]
  %s6 = inlined_call_operand.hbm [shape: f32[8,128], index: 6, kind: output, shape index: {}]
  %s7 = sld [smem:[#allocation0]]
  $region58: #{tpu_custom_call.1} parent=0
    _
  %s9 = ssub.s32 1, %s7
  %s10 = scalar_select 0, %s9, %s7
  $region1: #{tpu_custom_call.1} parent=0
    #allocation2 [shape = 'u8[4096]{0}', space=vmem, size = 0x1000, scoped, tag = 'input window, operand 0, single buffered']
    #allocation3 [shape = 's32[1]{0}', space=sflag, size = 0x4, scoped, tag = 'scoped memory for tpu_custom_call.1']
    #allocation4 [shape = 's32[1]{0}', space=sflag, size = 0x4, scoped, tag = 'scoped memory for tpu_custom_call.1']
    #allocation5 [shape = 'u8[4096]{0}', space=vmem, size = 0x1000, scoped, tag = 'input window, operand 1, single buffered']
    #allocation6 [shape = 's32[1]{0}', space=sflag, size = 0x4, scoped, tag = 'scoped memory for tpu_custom_call.1']
    #allocation7 [shape = 'u8[16384]{0}', space=vmem, size = 0x4000, scoped, tag = 'input window, operand 2, single buffered']
    #allocation8 [shape = 'u8[8192]{0}', space=vmem, size = 0x2000, scoped, tag = 'input window, operand 3, single buffered']
    #allocation9 [shape = 's32[1]{0}', space=sflag, size = 0x4, scoped, tag = 'scoped memory for tpu_custom_call.1']
    #allocation10 [shape = 'u8[65536]{0}', space=vmem, size = 0x10000, scoped, tag = 'input window, operand 4, single buffered']
    #allocation11 [shape = 'u8[16384]{0}', space=vmem, size = 0x4000, scoped, tag = 'input window, operand 5, single buffered']
    #allocation12 [shape = 's32[1]{0}', space=sflag, size = 0x4, scoped, tag = 'scoped memory for tpu_custom_call.1']
    #allocation13 [shape = 'u8[4096]{0}', space=vmem, size = 0x1000, scoped, tag = 'output window, operand 0, single buffered']
    %11 = vsyncpa [#allocation3], 0
    %12 = vsyncpa [#allocation6], 0
    %13 = vsyncpa [#allocation9], 0
    %14 = vsyncpa [#allocation12], 0
    %15 = vsyncpa [#allocation4], 0
    // Predicated region
    $region2: #{tpu_custom_call.1} parent=1 // pred_check
      _
    $region3: #{tpu_custom_call.1} parent=1 // pred_check_branch
      %17 = sbr.rel (0) target = $region5
    $region4: #{tpu_custom_call.1} parent=1 // pred_region
      %s19 = ssub.s32 128, 128
      %20 = vsyncadd [#allocation3], %s19
      %s22 = sshll.u32 [#allocation2], 4
      %s23 = int_to_ptr.vmem [resolvable:$true] %s22
      %25 = dma.hbm_to_vmem [thread:$0]  %s0, 128, %s23, [#allocation3]
    $region5: #{tpu_custom_call.1} parent=1 // pred_fallthru
      _
    // Predicated region
    $region6: #{tpu_custom_call.1} parent=1 // pred_check
      _
    $region7: #{tpu_custom_call.1} parent=1 // pred_check_branch
      %27 = sbr.rel (0) target = $region9
    $region8: #{tpu_custom_call.1} parent=1 // pred_region
      %s29 = ssub.s32 128, 128
      %30 = vsyncadd [#allocation6], %s29
      %s32 = sshll.u32 [#allocation5], 4
      %s33 = int_to_ptr.vmem [resolvable:$true] %s32
      %35 = dma.hbm_to_vmem [thread:$0]  %s1, 128, %s33, [#allocation6]
    $region9: #{tpu_custom_call.1} parent=1 // pred_fallthru
      _
    // Predicated region
    $region10: #{tpu_custom_call.1} parent=1 // pred_check
      _
    $region11: #{tpu_custom_call.1} parent=1 // pred_check_branch
      %37 = sbr.rel (0) target = $region13
    $region12: #{tpu_custom_call.1} parent=1 // pred_region
      %s39 = ssub.s32 512, 512
      %40 = vsyncadd [#allocation6], %s39
      %s41 = sshll.u32 [#allocation7], 4
      %s42 = int_to_ptr.vmem [resolvable:$true] %s41
      %47 = dma.hbm_to_vmem [thread:$0]  %s2, 512, %s42, [#allocation6], 128, 128, 8
    $region13: #{tpu_custom_call.1} parent=1 // pred_fallthru
      _
    // Predicated region
    $region14: #{tpu_custom_call.1} parent=1 // pred_check
      _
    $region15: #{tpu_custom_call.1} parent=1 // pred_check_branch
      %49 = sbr.rel (0) target = $region17
    $region16: #{tpu_custom_call.1} parent=1 // pred_region
      %s51 = ssub.s32 256, 256
      %52 = vsyncadd [#allocation9], %s51
      %s53 = sshll.u32 [#allocation8], 4
      %s54 = int_to_ptr.vmem [resolvable:$true] %s53
      %59 = dma.hbm_to_vmem [thread:$0]  %s3, 256, %s54, [#allocation9], 128, 128, 8
    $region17: #{tpu_custom_call.1} parent=1 // pred_fallthru
      _
    // Predicated region
    $region18: #{tpu_custom_call.1} parent=1 // pred_check
      _
    $region19: #{tpu_custom_call.1} parent=1 // pred_check_branch
      %61 = sbr.rel (0) target = $region21
    $region20: #{tpu_custom_call.1} parent=1 // pred_region
      %s63 = ssub.s32 2048, 2048
      %64 = vsyncadd [#allocation9], %s63
      %s65 = sshll.u32 [#allocation10], 4
      %s66 = int_to_ptr.vmem [resolvable:$true] %s65
      %71 = dma.hbm_to_vmem [thread:$0]  %s4, 2048, %s66, [#allocation9], 128, 128, 8
    $region21: #{tpu_custom_call.1} parent=1 // pred_fallthru
      _
    // Predicated region
    $region22: #{tpu_custom_call.1} parent=1 // pred_check
      _
    $region23: #{tpu_custom_call.1} parent=1 // pred_check_branch
      %73 = sbr.rel (0) target = $region25
    $region24: #{tpu_custom_call.1} parent=1 // pred_region
      %s75 = ssub.s32 512, 512
      %76 = vsyncadd [#allocation12], %s75
      %s77 = sshll.u32 [#allocation11], 4
      %s78 = int_to_ptr.vmem [resolvable:$true] %s77
      %83 = dma.hbm_to_vmem [thread:$0]  %s5, 512, %s78, [#allocation12], 128, 128, 8
    $region25: #{tpu_custom_call.1} parent=1 // pred_fallthru
      _
    // Predicated region
    $region26: #{tpu_custom_call.1} parent=1 // pred_check
      _
    $region27: #{tpu_custom_call.1} parent=1 // pred_check_branch
      %85 = sbr.rel (0) target = $region29
    $region28: #{tpu_custom_call.1} parent=1 // pred_region
      %86 = dma.done [#allocation3], 128
    $region29: #{tpu_custom_call.1} parent=1 // pred_fallthru
      _
    // Predicated region
    $region30: #{tpu_custom_call.1} parent=1 // pred_check
      _
    $region31: #{tpu_custom_call.1} parent=1 // pred_check_branch
      %88 = sbr.rel (0) target = $region33
    $region32: #{tpu_custom_call.1} parent=1 // pred_region
      %89 = dma.done [#allocation6], 128
    $region33: #{tpu_custom_call.1} parent=1 // pred_fallthru
      _
    // Predicated region
    $region34: #{tpu_custom_call.1} parent=1 // pred_check
      _
    $region35: #{tpu_custom_call.1} parent=1 // pred_check_branch
      %91 = sbr.rel (0) target = $region37
    $region36: #{tpu_custom_call.1} parent=1 // pred_region
      %92 = dma.done [#allocation6], 512
    $region37: #{tpu_custom_call.1} parent=1 // pred_fallthru
      _
    // Predicated region
    $region38: #{tpu_custom_call.1} parent=1 // pred_check
      _
    $region39: #{tpu_custom_call.1} parent=1 // pred_check_branch
      %94 = sbr.rel (0) target = $region41
    $region40: #{tpu_custom_call.1} parent=1 // pred_region
      %95 = dma.done [#allocation9], 256
    $region41: #{tpu_custom_call.1} parent=1 // pred_fallthru
      _
    // Predicated region
    $region42: #{tpu_custom_call.1} parent=1 // pred_check
      _
    $region43: #{tpu_custom_call.1} parent=1 // pred_check_branch
      %97 = sbr.rel (0) target = $region45
    $region44: #{tpu_custom_call.1} parent=1 // pred_region
      %98 = dma.done [#allocation9], 2048
    $region45: #{tpu_custom_call.1} parent=1 // pred_fallthru
      _
    // Predicated region
    $region46: #{tpu_custom_call.1} parent=1 // pred_check
      _
    $region47: #{tpu_custom_call.1} parent=1 // pred_check_branch
      %100 = sbr.rel (0) target = $region49
    $region48: #{tpu_custom_call.1} parent=1 // pred_region
      %101 = dma.done [#allocation12], 512
    $region49: #{tpu_custom_call.1} parent=1 // pred_fallthru
      _
    %v102 = vld [vmem:[#allocation2] sm:$0xff]
    %v103 = vld [vmem:[#allocation5] sm:$0xff]
    %v104 = vld [vmem:[#allocation7] sm:$0xff]
    %v105 = vld [vmem:[#allocation7 + $0x8] sm:$0xff]
    %v106 = vld [vmem:[#allocation7 + $0x10] sm:$0xff]
    %v107 = vld [vmem:[#allocation7 + $0x18] sm:$0xff]
    %v108 = vld [vmem:[#allocation8] sm:$0xff]
    %v109 = vld [vmem:[#allocation8 + $0x8] sm:$0xff]
    %v110 = vld [vmem:[#allocation10] sm:$0xff]
    %v111 = vld [vmem:[#allocation10 + $0x8] sm:$0xff]
    %v112 = vld [vmem:[#allocation10 + $0x10] sm:$0xff]
    %v113 = vld [vmem:[#allocation10 + $0x18] sm:$0xff]
    %v114 = vld [vmem:[#allocation10 + $0x20] sm:$0xff]
    %v115 = vld [vmem:[#allocation10 + $0x28] sm:$0xff]
    %v116 = vld [vmem:[#allocation10 + $0x30] sm:$0xff]
    %v117 = vld [vmem:[#allocation10 + $0x38] sm:$0xff]
    %v118 = vld [vmem:[#allocation10 + $0x40] sm:$0xff]
    %v119 = vld [vmem:[#allocation10 + $0x48] sm:$0xff]
    %v120 = vld [vmem:[#allocation10 + $0x50] sm:$0xff]
    %v121 = vld [vmem:[#allocation10 + $0x58] sm:$0xff]
    %v122 = vld [vmem:[#allocation10 + $0x60] sm:$0xff]
    %v123 = vld [vmem:[#allocation10 + $0x68] sm:$0xff]
    %v124 = vld [vmem:[#allocation10 + $0x70] sm:$0xff]
    %v125 = vld [vmem:[#allocation10 + $0x78] sm:$0xff]
    %v126 = vld [vmem:[#allocation11] sm:$0xff]
    %v127 = vld [vmem:[#allocation11 + $0x8] sm:$0xff]
    %v128 = vld [vmem:[#allocation11 + $0x10] sm:$0xff]
    %v129 = vld [vmem:[#allocation11 + $0x18] sm:$0xff]
    %v130 = vmul.f32 %v102, %v102
    %vm131 = vcmask 261120
    %v132 = vsel %vm131, %v130, 0.0
    %133 = vadd.xlane.f32.xlu0 %v132
    %v134 = vpop.xlane.xlu0 %133
    %v135 = vrsqrt.pop %v134
    %v136 = vmul.f32 %v102, %v135
    %v138 = vsel %vm131, %v102, 0
    %140 = vmatprep.subr.mxu0 0.0
    %141 = vmatpush1.msra.mxu0 %v104
    %142 = vmatprep.subr.mxu0 0.0
    %143 = vmatpush1.msra.mxu0 %v105
    %144 = vmatprep.subr.mxu0 0.0
    %145 = vmatpush1.msra.mxu0 %v106
    %146 = vmatprep.subr.mxu0 0.0
    %147 = vmatpush1.msra.mxu0 %v107
    %148 = vmatprep.subr.mxu0 0.0
    %149 = vmatpush1.msra.mxu0 0.0
    %150 = vmatprep.subr.mxu0 0.0
    %151 = vmatpush1.msra.mxu0 0.0
    %152 = vmatprep.subr.mxu0 0.0
    %153 = vmatpush1.msra.mxu0 0.0
    %154 = vmatprep.subr.mxu0 0.0
    %155 = vmatpush1.msra.mxu0 0.0
    %156 = vmatprep.subr.mxu0 0.0
    %157 = vmatpush1.msra.mxu0 0.0
    %158 = vmatprep.subr.mxu0 0.0
    %159 = vmatpush1.msra.mxu0 0.0
    %160 = vmatprep.subr.mxu0 0.0
    %161 = vmatpush1.msra.mxu0 0.0
    %162 = vmatprep.subr.mxu0 0.0
    %163 = vmatpush1.msra.mxu0 0.0
    %164 = vmatprep.subr.mxu0 0.0
    %165 = vmatpush1.msra.mxu0 0.0
    %166 = vmatprep.subr.mxu0 0.0
    %167 = vmatpush1.msra.mxu0 0.0
    %168 = vmatprep.subr.mxu0 0.0
    %169 = vmatpush1.msra.mxu0 0.0
    %170 = vmatprep.subr.mxu0 0.0
    %171 = vmatpush1.msra.mxu0 0.0
    %172 = vmatprep.subr.mxu0 0.0
    %173 = vmatpush1.msra.mxu0 0.0
    %174 = vmatprep.subr.mxu0 0.0
    %175 = vmatpush1.msra.mxu0 0.0
    %176 = vmatprep.subr.mxu0 0.0
    %177 = vmatpush1.msra.mxu0 0.0
    %178 = vmatprep.subr.mxu0 0.0
    %179 = vmatpush1.msra.mxu0 0.0
    %180 = vmatprep.subr.mxu0 0.0
    %181 = vmatpush1.msra.mxu0 0.0
    %182 = vmatprep.subr.mxu0 0.0
    %183 = vmatpush1.msra.mxu0 0.0
    %184 = vmatprep.subr.mxu0 0.0
    %185 = vmatpush1.msra.mxu0 0.0
    %186 = vmatprep.subr.mxu0 0.0
    %187 = vmatpush1.msra.mxu0 0.0
    %188 = vmatprep.subr.mxu0 0.0
    %189 = vmatpush1.msra.mxu0 0.0
    %190 = vmatprep.subr.mxu0 0.0
    %191 = vmatpush1.msra.mxu0 0.0
    %192 = vmatprep.subr.mxu0 0.0
    %193 = vmatpush1.msra.mxu0 0.0
    %194 = vmatprep.subr.mxu0 0.0
    %195 = vmatpush1.msra.mxu0 0.0
    %196 = vmatprep.subr.mxu0 0.0
    %197 = vmatpush1.msra.mxu0 0.0
    %198 = vmatprep.subr.mxu0 0.0
    %199 = vmatpush1.msra.mxu0 0.0
    %200 = vmatprep.subr.mxu0 0.0
    %201 = vmatpush1.msra.mxu0 0.0
    %202 = vmatprep.subr.mxu0 0.0
    %203 = vmatpush1.msra.mxu0 0.0
    %204 = vmatprep.mubr.f32.mxu0 0.0
    %205 = vmatmul.mubr.f32.gmra.mrb[0].mxu0 %v138
    %v206 = vpop.f32.mrb[0].mxu0
    %v207 = vadd.f32 0.0, %v206
    %v208 = vpop.f32.mrb[0].mxu0
    %209 = vdwg.mxu0
    %vm210 = vcmask 130048
    %v212 = vsel %vm210, %v103, 0
    %214 = vmatprep.subr.mxu0 0.0
    %215 = vmatpush1.msra.mxu0 %v108
    %216 = vmatprep.subr.mxu0 0.0
    %217 = vmatpush1.msra.mxu0 %v109
    %218 = vmatprep.subr.mxu0 0.0
    %219 = vmatpush1.msra.mxu0 0.0
    %220 = vmatprep.subr.mxu0 0.0
    %221 = vmatpush1.msra.mxu0 0.0
    %222 = vmatprep.subr.mxu0 0.0
    %223 = vmatpush1.msra.mxu0 0.0
    %224 = vmatprep.subr.mxu0 0.0
    %225 = vmatpush1.msra.mxu0 0.0
    %226 = vmatprep.subr.mxu0 0.0
    %227 = vmatpush1.msra.mxu0 0.0
    %228 = vmatprep.subr.mxu0 0.0
    %229 = vmatpush1.msra.mxu0 0.0
    %230 = vmatprep.subr.mxu0 0.0
    %231 = vmatpush1.msra.mxu0 0.0
    %232 = vmatprep.subr.mxu0 0.0
    %233 = vmatpush1.msra.mxu0 0.0
    %234 = vmatprep.subr.mxu0 0.0
    %235 = vmatpush1.msra.mxu0 0.0
    %236 = vmatprep.subr.mxu0 0.0
    %237 = vmatpush1.msra.mxu0 0.0
    %238 = vmatprep.subr.mxu0 0.0
    %239 = vmatpush1.msra.mxu0 0.0
    %240 = vmatprep.subr.mxu0 0.0
    %241 = vmatpush1.msra.mxu0 0.0
    %242 = vmatprep.subr.mxu0 0.0
    %243 = vmatpush1.msra.mxu0 0.0
    %244 = vmatprep.subr.mxu0 0.0
    %245 = vmatpush1.msra.mxu0 0.0
    %246 = vmatprep.subr.mxu0 0.0
    %247 = vmatpush1.msra.mxu0 0.0
    %248 = vmatprep.subr.mxu0 0.0
    %249 = vmatpush1.msra.mxu0 0.0
    %250 = vmatprep.subr.mxu0 0.0
    %251 = vmatpush1.msra.mxu0 0.0
    %252 = vmatprep.subr.mxu0 0.0
    %253 = vmatpush1.msra.mxu0 0.0
    %254 = vmatprep.subr.mxu0 0.0
    %255 = vmatpush1.msra.mxu0 0.0
    %256 = vmatprep.subr.mxu0 0.0
    %257 = vmatpush1.msra.mxu0 0.0
    %258 = vmatprep.subr.mxu0 0.0
    %259 = vmatpush1.msra.mxu0 0.0
    %260 = vmatprep.subr.mxu0 0.0
    %261 = vmatpush1.msra.mxu0 0.0
    %262 = vmatprep.subr.mxu0 0.0
    %263 = vmatpush1.msra.mxu0 0.0
    %264 = vmatprep.subr.mxu0 0.0
    %265 = vmatpush1.msra.mxu0 0.0
    %266 = vmatprep.subr.mxu0 0.0
    %267 = vmatpush1.msra.mxu0 0.0
    %268 = vmatprep.subr.mxu0 0.0
    %269 = vmatpush1.msra.mxu0 0.0
    %270 = vmatprep.subr.mxu0 0.0
    %271 = vmatpush1.msra.mxu0 0.0
    %272 = vmatprep.subr.mxu0 0.0
    %273 = vmatpush1.msra.mxu0 0.0
    %274 = vmatprep.subr.mxu0 0.0
    %275 = vmatpush1.msra.mxu0 0.0
    %276 = vmatprep.subr.mxu0 0.0
    %277 = vmatpush1.msra.mxu0 0.0
    %278 = vmatprep.mubr.f32.mxu0 0.0
    %279 = vmatmul.mubr.f32.gmra.mrb[0].mxu0 %v212
    %v280 = vpop.f32.mrb[0].mxu0
    %v281 = vadd.f32 0.0, %v280
    %v282 = vpop.f32.mrb[0].mxu0
    %283 = vdwg.mxu0
    %284 = vxpose.xlu0.b32.start [1/16] %v136, 128
    %285 = vxpose.xlu0.b32.cont [2/16] 0.0, 128
    %286 = vxpose.xlu0.b32.cont [3/16] 0.0, 128
    %287 = vxpose.xlu0.b32.cont [4/16] 0.0, 128
    %288 = vxpose.xlu0.b32.cont [5/16] 0.0, 128
    %289 = vxpose.xlu0.b32.cont [6/16] 0.0, 128
    %290 = vxpose.xlu0.b32.cont [7/16] 0.0, 128
    %291 = vxpose.xlu0.b32.cont [8/16] 0.0, 128
    %292 = vxpose.xlu0.b32.cont [9/16] 0.0, 128
    %293 = vxpose.xlu0.b32.cont [10/16] 0.0, 128
    %294 = vxpose.xlu0.b32.cont [11/16] 0.0, 128
    %295 = vxpose.xlu0.b32.cont [12/16] 0.0, 128
    %296 = vxpose.xlu0.b32.cont [13/16] 0.0, 128
    %297 = vxpose.xlu0.b32.cont [14/16] 0.0, 128
    %298 = vxpose.xlu0.b32.cont [15/16] 0.0, 128
    %299 = vxpose.xlu0.b32.end [16/16] 0.0, 128
    %v300 = vpop.trf.xlu0
    %v301 = vpop.trf.xlu0
    %v302 = vpop.trf.xlu0
    %v303 = vpop.trf.xlu0
    %v304 = vpop.trf.xlu0
    %v305 = vpop.trf.xlu0
    %v306 = vpop.trf.xlu0
    %v307 = vpop.trf.xlu0
    %v308 = vpop.trf.xlu0
    %v309 = vpop.trf.xlu0
    %v310 = vpop.trf.xlu0
    %v311 = vpop.trf.xlu0
    %v312 = vpop.trf.xlu0
    %v313 = vpop.trf.xlu0
    %v314 = vpop.trf.xlu0
    %v315 = vpop.trf.xlu0
    %vm316 = vcmask 64512
    %v318 = vsel %vm316, %v300, 0
    %v321 = vsel %vm316, %v301, 0
    %v324 = vsel %vm316, %v302, 0
    %v327 = vsel %vm316, %v303, 0
    %329 = vmatprep.subr.mxu0 0.0
    %330 = vmatpush1.msra.mxu0 %v207
    %331 = vmatprep.subr.mxu0 0.0
    %332 = vmatpush1.msra.mxu0 0.0
    %333 = vmatprep.subr.mxu0 0.0
    %334 = vmatpush1.msra.mxu0 0.0
    %335 = vmatprep.subr.mxu0 0.0
    %336 = vmatpush1.msra.mxu0 0.0
    %337 = vmatprep.subr.mxu0 0.0
    %338 = vmatpush1.msra.mxu0 0.0
    %339 = vmatprep.subr.mxu0 0.0
    %340 = vmatpush1.msra.mxu0 0.0
    %341 = vmatprep.subr.mxu0 0.0
    %342 = vmatpush1.msra.mxu0 0.0
    %343 = vmatprep.subr.mxu0 0.0
    %344 = vmatpush1.msra.mxu0 0.0
    %345 = vmatprep.subr.mxu0 0.0
    %346 = vmatpush1.msra.mxu0 0.0
    %347 = vmatprep.subr.mxu0 0.0
    %348 = vmatpush1.msra.mxu0 0.0
    %349 = vmatprep.subr.mxu0 0.0
    %350 = vmatpush1.msra.mxu0 0.0
    %351 = vmatprep.subr.mxu0 0.0
    %352 = vmatpush1.msra.mxu0 0.0
    %353 = vmatprep.subr.mxu0 0.0
    %354 = vmatpush1.msra.mxu0 0.0
    %355 = vmatprep.subr.mxu0 0.0
    %356 = vmatpush1.msra.mxu0 0.0
    %357 = vmatprep.subr.mxu0 0.0
    %358 = vmatpush1.msra.mxu0 0.0
    %359 = vmatprep.subr.mxu0 0.0
    %360 = vmatpush1.msra.mxu0 0.0
    %361 = vmatprep.subr.mxu0 0.0
    %362 = vmatpush1.msra.mxu0 0.0
    %363 = vmatprep.subr.mxu0 0.0
    %364 = vmatpush1.msra.mxu0 0.0
    %365 = vmatprep.subr.mxu0 0.0
    %366 = vmatpush1.msra.mxu0 0.0
    %367 = vmatprep.subr.mxu0 0.0
    %368 = vmatpush1.msra.mxu0 0.0
    %369 = vmatprep.subr.mxu0 0.0
    %370 = vmatpush1.msra.mxu0 0.0
    %371 = vmatprep.subr.mxu0 0.0
    %372 = vmatpush1.msra.mxu0 0.0
    %373 = vmatprep.subr.mxu0 0.0
    %374 = vmatpush1.msra.mxu0 0.0
    %375 = vmatprep.subr.mxu0 0.0
    %376 = vmatpush1.msra.mxu0 0.0
    %377 = vmatprep.subr.mxu0 0.0
    %378 = vmatpush1.msra.mxu0 0.0
    %379 = vmatprep.subr.mxu0 0.0
    %380 = vmatpush1.msra.mxu0 0.0
    %381 = vmatprep.subr.mxu0 0.0
    %382 = vmatpush1.msra.mxu0 0.0
    %383 = vmatprep.subr.mxu0 0.0
    %384 = vmatpush1.msra.mxu0 0.0
    %385 = vmatprep.subr.mxu0 0.0
    %386 = vmatpush1.msra.mxu0 0.0
    %387 = vmatprep.subr.mxu0 0.0
    %388 = vmatpush1.msra.mxu0 0.0
    %389 = vmatprep.subr.mxu0 0.0
    %390 = vmatpush1.msra.mxu0 0.0
    %391 = vmatprep.subr.mxu0 0.0
    %392 = vmatpush1.msra.mxu0 0.0
    %393 = vmatprep.mubr.f32.mxu0 0.0
    %394 = vmatmul.mubr.f32.gmra.mrb[0].mxu0 %v318
    %v395 = vpop.f32.mrb[0].mxu0
    %v396 = vadd.f32 0.0, %v395
    %v397 = vpop.f32.mrb[0].mxu0
    %398 = vmatprep.mubr.f32.mxu0 0.0
    %399 = vmatmul.mubr.f32.gmra.mrb[0].mxu0 %v321
    %v400 = vpop.f32.mrb[0].mxu0
    %v401 = vadd.f32 0.0, %v400
    %v402 = vpop.f32.mrb[0].mxu0
    %403 = vmatprep.mubr.f32.mxu0 0.0
    %404 = vmatmul.mubr.f32.gmra.mrb[0].mxu0 %v324
    %v405 = vpop.f32.mrb[0].mxu0
    %v406 = vadd.f32 0.0, %v405
    %v407 = vpop.f32.mrb[0].mxu0
    %408 = vmatprep.mubr.f32.mxu0 0.0
    %409 = vmatmul.mubr.f32.gmra.mrb[0].mxu0 %v327
    %v410 = vpop.f32.mrb[0].mxu0
    %v411 = vadd.f32 0.0, %v410
    %v412 = vpop.f32.mrb[0].mxu0
    %413 = vdwg.mxu0
    %v414 = vrot.slane %v207, 4
    %v415 = vadd.f32 %v207, %v414
    %v416 = vrot.slane %v415, 2
    %v417 = vadd.f32 %v415, %v416
    %v418 = vrot.slane %v417, 1
    %v419 = vadd.f32 %v417, %v418
    %v421 = vsel %vm131, %v136, 0
    %423 = vmatprep.subr.mxu0 0.0
    %424 = vmatpush1.msra.mxu0 %v396
    %425 = vmatprep.subr.mxu0 0.0
    %426 = vmatpush1.msra.mxu0 %v401
    %427 = vmatprep.subr.mxu0 0.0
    %428 = vmatpush1.msra.mxu0 %v406
    %429 = vmatprep.subr.mxu0 0.0
    %430 = vmatpush1.msra.mxu0 %v411
    %431 = vmatprep.subr.mxu0 0.0
    %432 = vmatpush1.msra.mxu0 0.0
    %433 = vmatprep.subr.mxu0 0.0
    %434 = vmatpush1.msra.mxu0 0.0
    %435 = vmatprep.subr.mxu0 0.0
    %436 = vmatpush1.msra.mxu0 0.0
    %437 = vmatprep.subr.mxu0 0.0
    %438 = vmatpush1.msra.mxu0 0.0
    %439 = vmatprep.subr.mxu0 0.0
    %440 = vmatpush1.msra.mxu0 0.0
    %441 = vmatprep.subr.mxu0 0.0
    %442 = vmatpush1.msra.mxu0 0.0
    %443 = vmatprep.subr.mxu0 0.0
    %444 = vmatpush1.msra.mxu0 0.0
    %445 = vmatprep.subr.mxu0 0.0
    %446 = vmatpush1.msra.mxu0 0.0
    %447 = vmatprep.subr.mxu0 0.0
    %448 = vmatpush1.msra.mxu0 0.0
    %449 = vmatprep.subr.mxu0 0.0
    %450 = vmatpush1.msra.mxu0 0.0
    %451 = vmatprep.subr.mxu0 0.0
    %452 = vmatpush1.msra.mxu0 0.0
    %453 = vmatprep.subr.mxu0 0.0
    %454 = vmatpush1.msra.mxu0 0.0
    %455 = vmatprep.subr.mxu0 0.0
    %456 = vmatpush1.msra.mxu0 0.0
    %457 = vmatprep.subr.mxu0 0.0
    %458 = vmatpush1.msra.mxu0 0.0
    %459 = vmatprep.subr.mxu0 0.0
    %460 = vmatpush1.msra.mxu0 0.0
    %461 = vmatprep.subr.mxu0 0.0
    %462 = vmatpush1.msra.mxu0 0.0
    %463 = vmatprep.subr.mxu0 0.0
    %464 = vmatpush1.msra.mxu0 0.0
    %465 = vmatprep.subr.mxu0 0.0
    %466 = vmatpush1.msra.mxu0 0.0
    %467 = vmatprep.subr.mxu0 0.0
    %468 = vmatpush1.msra.mxu0 0.0
    %469 = vmatprep.subr.mxu0 0.0
    %470 = vmatpush1.msra.mxu0 0.0
    %471 = vmatprep.subr.mxu0 0.0
    %472 = vmatpush1.msra.mxu0 0.0
    %473 = vmatprep.subr.mxu0 0.0
    %474 = vmatpush1.msra.mxu0 0.0
    %475 = vmatprep.subr.mxu0 0.0
    %476 = vmatpush1.msra.mxu0 0.0
    %477 = vmatprep.subr.mxu0 0.0
    %478 = vmatpush1.msra.mxu0 0.0
    %479 = vmatprep.subr.mxu0 0.0
    %480 = vmatpush1.msra.mxu0 0.0
    %481 = vmatprep.subr.mxu0 0.0
    %482 = vmatpush1.msra.mxu0 0.0
    %483 = vmatprep.subr.mxu0 0.0
    %484 = vmatpush1.msra.mxu0 0.0
    %485 = vmatprep.subr.mxu0 0.0
    %486 = vmatpush1.msra.mxu0 0.0
    %487 = vmatprep.mubr.f32.mxu0 0.0
    %488 = vmatmul.mubr.f32.gmra.mrb[0].mxu0 %v421
    %v489 = vpop.f32.mrb[0].mxu0
    %v490 = vadd.f32 %v419, %v489
    %v491 = vpop.f32.mrb[0].mxu0
    %492 = vdwg.mxu0
    %v493 = vmax.f32 %v490, 0.0
    %494 = vmatprep.subr.mxu0 0.0
    %495 = vmatpush1.msra.mxu0 %v281
    %496 = vmatprep.subr.mxu0 0.0
    %497 = vmatpush1.msra.mxu0 0.0
    %498 = vmatprep.subr.mxu0 0.0
    %499 = vmatpush1.msra.mxu0 0.0
    %500 = vmatprep.subr.mxu0 0.0
    %501 = vmatpush1.msra.mxu0 0.0
    %502 = vmatprep.subr.mxu0 0.0
    %503 = vmatpush1.msra.mxu0 0.0
    %504 = vmatprep.subr.mxu0 0.0
    %505 = vmatpush1.msra.mxu0 0.0
    %506 = vmatprep.subr.mxu0 0.0
    %507 = vmatpush1.msra.mxu0 0.0
    %508 = vmatprep.subr.mxu0 0.0
    %509 = vmatpush1.msra.mxu0 0.0
    %510 = vmatprep.subr.mxu0 0.0
    %511 = vmatpush1.msra.mxu0 0.0
    %512 = vmatprep.subr.mxu0 0.0
    %513 = vmatpush1.msra.mxu0 0.0
    %514 = vmatprep.subr.mxu0 0.0
    %515 = vmatpush1.msra.mxu0 0.0
    %516 = vmatprep.subr.mxu0 0.0
    %517 = vmatpush1.msra.mxu0 0.0
    %518 = vmatprep.subr.mxu0 0.0
    %519 = vmatpush1.msra.mxu0 0.0
    %520 = vmatprep.subr.mxu0 0.0
    %521 = vmatpush1.msra.mxu0 0.0
    %522 = vmatprep.subr.mxu0 0.0
    %523 = vmatpush1.msra.mxu0 0.0
    %524 = vmatprep.subr.mxu0 0.0
    %525 = vmatpush1.msra.mxu0 0.0
    %526 = vmatprep.subr.mxu0 0.0
    %527 = vmatpush1.msra.mxu0 0.0
    %528 = vmatprep.subr.mxu0 0.0
    %529 = vmatpush1.msra.mxu0 0.0
    %530 = vmatprep.subr.mxu0 0.0
    %531 = vmatpush1.msra.mxu0 0.0
    %532 = vmatprep.subr.mxu0 0.0
    %533 = vmatpush1.msra.mxu0 0.0
    %534 = vmatprep.subr.mxu0 0.0
    %535 = vmatpush1.msra.mxu0 0.0
    %536 = vmatprep.subr.mxu0 0.0
    %537 = vmatpush1.msra.mxu0 0.0
    %538 = vmatprep.subr.mxu0 0.0
    %539 = vmatpush1.msra.mxu0 0.0
    %540 = vmatprep.subr.mxu0 0.0
    %541 = vmatpush1.msra.mxu0 0.0
    %542 = vmatprep.subr.mxu0 0.0
    %543 = vmatpush1.msra.mxu0 0.0
    %544 = vmatprep.subr.mxu0 0.0
    %545 = vmatpush1.msra.mxu0 0.0
    %546 = vmatprep.subr.mxu0 0.0
    %547 = vmatpush1.msra.mxu0 0.0
    %548 = vmatprep.subr.mxu0 0.0
    %549 = vmatpush1.msra.mxu0 0.0
    %550 = vmatprep.subr.mxu0 0.0
    %551 = vmatpush1.msra.mxu0 0.0
    %552 = vmatprep.subr.mxu0 0.0
    %553 = vmatpush1.msra.mxu0 0.0
    %554 = vmatprep.subr.mxu0 0.0
    %555 = vmatpush1.msra.mxu0 0.0
    %556 = vmatprep.subr.mxu0 0.0
    %557 = vmatpush1.msra.mxu0 0.0
    %558 = vmatprep.mubr.f32.mxu0 0.0
    %559 = vmatmul.mubr.f32.gmra.mrb[0].mxu0 %v318
    %v560 = vpop.f32.mrb[0].mxu0
    %v561 = vadd.f32 0.0, %v560
    %v562 = vpop.f32.mrb[0].mxu0
    %563 = vmatprep.mubr.f32.mxu0 0.0
    %564 = vmatmul.mubr.f32.gmra.mrb[0].mxu0 %v321
    %v565 = vpop.f32.mrb[0].mxu0
    %v566 = vadd.f32 0.0, %v565
    %v567 = vpop.f32.mrb[0].mxu0
    %568 = vmatprep.mubr.f32.mxu0 0.0
    %569 = vmatmul.mubr.f32.gmra.mrb[0].mxu0 %v324
    %v570 = vpop.f32.mrb[0].mxu0
    %v571 = vadd.f32 0.0, %v570
    %v572 = vpop.f32.mrb[0].mxu0
    %573 = vmatprep.mubr.f32.mxu0 0.0
    %574 = vmatmul.mubr.f32.gmra.mrb[0].mxu0 %v327
    %v575 = vpop.f32.mrb[0].mxu0
    %v576 = vadd.f32 0.0, %v575
    %v577 = vpop.f32.mrb[0].mxu0
    %578 = vdwg.mxu0
    %v579 = vrot.slane %v281, 4
    %v580 = vadd.f32 %v281, %v579
    %v581 = vrot.slane %v580, 2
    %v582 = vadd.f32 %v580, %v581
    %v583 = vrot.slane %v582, 1
    %v584 = vadd.f32 %v582, %v583
    %585 = vmatprep.subr.mxu0 0.0
    %586 = vmatpush1.msra.mxu0 %v561
    %587 = vmatprep.subr.mxu0 0.0
    %588 = vmatpush1.msra.mxu0 %v566
    %589 = vmatprep.subr.mxu0 0.0
    %590 = vmatpush1.msra.mxu0 %v571
    %591 = vmatprep.subr.mxu0 0.0
    %592 = vmatpush1.msra.mxu0 %v576
    %593 = vmatprep.subr.mxu0 0.0
    %594 = vmatpush1.msra.mxu0 0.0
    %595 = vmatprep.subr.mxu0 0.0
    %596 = vmatpush1.msra.mxu0 0.0
    %597 = vmatprep.subr.mxu0 0.0
    %598 = vmatpush1.msra.mxu0 0.0
    %599 = vmatprep.subr.mxu0 0.0
    %600 = vmatpush1.msra.mxu0 0.0
    %601 = vmatprep.subr.mxu0 0.0
    %602 = vmatpush1.msra.mxu0 0.0
    %603 = vmatprep.subr.mxu0 0.0
    %604 = vmatpush1.msra.mxu0 0.0
    %605 = vmatprep.subr.mxu0 0.0
    %606 = vmatpush1.msra.mxu0 0.0
    %607 = vmatprep.subr.mxu0 0.0
    %608 = vmatpush1.msra.mxu0 0.0
    %609 = vmatprep.subr.mxu0 0.0
    %610 = vmatpush1.msra.mxu0 0.0
    %611 = vmatprep.subr.mxu0 0.0
    %612 = vmatpush1.msra.mxu0 0.0
    %613 = vmatprep.subr.mxu0 0.0
    %614 = vmatpush1.msra.mxu0 0.0
    %615 = vmatprep.subr.mxu0 0.0
    %616 = vmatpush1.msra.mxu0 0.0
    %617 = vmatprep.subr.mxu0 0.0
    %618 = vmatpush1.msra.mxu0 0.0
    %619 = vmatprep.subr.mxu0 0.0
    %620 = vmatpush1.msra.mxu0 0.0
    %621 = vmatprep.subr.mxu0 0.0
    %622 = vmatpush1.msra.mxu0 0.0
    %623 = vmatprep.subr.mxu0 0.0
    %624 = vmatpush1.msra.mxu0 0.0
    %625 = vmatprep.subr.mxu0 0.0
    %626 = vmatpush1.msra.mxu0 0.0
    %627 = vmatprep.subr.mxu0 0.0
    %628 = vmatpush1.msra.mxu0 0.0
    %629 = vmatprep.subr.mxu0 0.0
    %630 = vmatpush1.msra.mxu0 0.0
    %631 = vmatprep.subr.mxu0 0.0
    %632 = vmatpush1.msra.mxu0 0.0
    %633 = vmatprep.subr.mxu0 0.0
    %634 = vmatpush1.msra.mxu0 0.0
    %635 = vmatprep.subr.mxu0 0.0
    %636 = vmatpush1.msra.mxu0 0.0
    %637 = vmatprep.subr.mxu0 0.0
    %638 = vmatpush1.msra.mxu0 0.0
    %639 = vmatprep.subr.mxu0 0.0
    %640 = vmatpush1.msra.mxu0 0.0
    %641 = vmatprep.subr.mxu0 0.0
    %642 = vmatpush1.msra.mxu0 0.0
    %643 = vmatprep.subr.mxu0 0.0
    %644 = vmatpush1.msra.mxu0 0.0
    %645 = vmatprep.subr.mxu0 0.0
    %646 = vmatpush1.msra.mxu0 0.0
    %647 = vmatprep.subr.mxu0 0.0
    %648 = vmatpush1.msra.mxu0 0.0
    %649 = vmatprep.mubr.f32.mxu0 0.0
    %650 = vmatmul.mubr.f32.gmra.mrb[0].mxu0 %v421
    %v651 = vpop.f32.mrb[0].mxu0
    %v652 = vadd.f32 %v584, %v651
    %v653 = vpop.f32.mrb[0].mxu0
    %654 = vdwg.mxu0
    %v655 = vmax.f32 %v652, 0.0
    %v656 = vadd.f32 %v493, %v655
    %657 = vmatprep.subr.mxu0 0.0
    %658 = vmatpush1.msra.mxu0 %v110
    %659 = vmatprep.subr.mxu0 0.0
    %660 = vmatpush1.msra.mxu0 %v111
    %661 = vmatprep.subr.mxu0 0.0
    %662 = vmatpush1.msra.mxu0 %v112
    %663 = vmatprep.subr.mxu0 0.0
    %664 = vmatpush1.msra.mxu0 %v113
    %665 = vmatprep.subr.mxu0 0.0
    %666 = vmatpush1.msra.mxu0 %v114
    %667 = vmatprep.subr.mxu0 0.0
    %668 = vmatpush1.msra.mxu0 %v115
    %669 = vmatprep.subr.mxu0 0.0
    %670 = vmatpush1.msra.mxu0 %v116
    %671 = vmatprep.subr.mxu0 0.0
    %672 = vmatpush1.msra.mxu0 %v117
    %673 = vmatprep.subr.mxu0 0.0
    %674 = vmatpush1.msra.mxu0 %v118
    %675 = vmatprep.subr.mxu0 0.0
    %676 = vmatpush1.msra.mxu0 %v119
    %677 = vmatprep.subr.mxu0 0.0
    %678 = vmatpush1.msra.mxu0 %v120
    %679 = vmatprep.subr.mxu0 0.0
    %680 = vmatpush1.msra.mxu0 %v121
    %681 = vmatprep.subr.mxu0 0.0
    %682 = vmatpush1.msra.mxu0 %v122
    %683 = vmatprep.subr.mxu0 0.0
    %684 = vmatpush1.msra.mxu0 %v123
    %685 = vmatprep.subr.mxu0 0.0
    %686 = vmatpush1.msra.mxu0 %v124
    %687 = vmatprep.subr.mxu0 0.0
    %688 = vmatpush1.msra.mxu0 %v125
    %689 = vmatprep.subr.mxu0 0.0
    %690 = vmatpush1.msra.mxu0 0.0
    %691 = vmatprep.subr.mxu0 0.0
    %692 = vmatpush1.msra.mxu0 0.0
    %693 = vmatprep.subr.mxu0 0.0
    %694 = vmatpush1.msra.mxu0 0.0
    %695 = vmatprep.subr.mxu0 0.0
    %696 = vmatpush1.msra.mxu0 0.0
    %697 = vmatprep.subr.mxu0 0.0
    %698 = vmatpush1.msra.mxu0 0.0
    %699 = vmatprep.subr.mxu0 0.0
    %700 = vmatpush1.msra.mxu0 0.0
    %701 = vmatprep.subr.mxu0 0.0
    %702 = vmatpush1.msra.mxu0 0.0
    %703 = vmatprep.subr.mxu0 0.0
    %704 = vmatpush1.msra.mxu0 0.0
    %705 = vmatprep.subr.mxu0 0.0
    %706 = vmatpush1.msra.mxu0 0.0
    %707 = vmatprep.subr.mxu0 0.0
    %708 = vmatpush1.msra.mxu0 0.0
    %709 = vmatprep.subr.mxu0 0.0
    %710 = vmatpush1.msra.mxu0 0.0
    %711 = vmatprep.subr.mxu0 0.0
    %712 = vmatpush1.msra.mxu0 0.0
    %713 = vmatprep.subr.mxu0 0.0
    %714 = vmatpush1.msra.mxu0 0.0
    %715 = vmatprep.subr.mxu0 0.0
    %716 = vmatpush1.msra.mxu0 0.0
    %717 = vmatprep.subr.mxu0 0.0
    %718 = vmatpush1.msra.mxu0 0.0
    %719 = vmatprep.subr.mxu0 0.0
    %720 = vmatpush1.msra.mxu0 0.0
    %721 = vmatprep.mubr.f32.mxu0 0.0
    %722 = vmatmul.mubr.f32.gmra.mrb[0].mxu0 %v656
    %v723 = vpop.f32.mrb[0].mxu0
    %v724 = vadd.f32 0.0, %v723
    %v725 = vpop.f32.mrb[0].mxu0
    %726 = vdwg.mxu0
    %727 = vmatprep.subr.mxu0 0.0
    %728 = vmatpush1.msra.mxu0 %v724
    %729 = vmatprep.subr.mxu0 0.0
    %730 = vmatpush1.msra.mxu0 0.0
    %731 = vmatprep.subr.mxu0 0.0
    %732 = vmatpush1.msra.mxu0 0.0
    %733 = vmatprep.subr.mxu0 0.0
    %734 = vmatpush1.msra.mxu0 0.0
    %735 = vmatprep.subr.mxu0 0.0
    %736 = vmatpush1.msra.mxu0 0.0
    %737 = vmatprep.subr.mxu0 0.0
    %738 = vmatpush1.msra.mxu0 0.0
    %739 = vmatprep.subr.mxu0 0.0
    %740 = vmatpush1.msra.mxu0 0.0
    %741 = vmatprep.subr.mxu0 0.0
    %742 = vmatpush1.msra.mxu0 0.0
    %743 = vmatprep.subr.mxu0 0.0
    %744 = vmatpush1.msra.mxu0 0.0
    %745 = vmatprep.subr.mxu0 0.0
    %746 = vmatpush1.msra.mxu0 0.0
    %747 = vmatprep.subr.mxu0 0.0
    %748 = vmatpush1.msra.mxu0 0.0
    %749 = vmatprep.subr.mxu0 0.0
    %750 = vmatpush1.msra.mxu0 0.0
    %751 = vmatprep.subr.mxu0 0.0
    %752 = vmatpush1.msra.mxu0 0.0
    %753 = vmatprep.subr.mxu0 0.0
    %754 = vmatpush1.msra.mxu0 0.0
    %755 = vmatprep.subr.mxu0 0.0
    %756 = vmatpush1.msra.mxu0 0.0
    %757 = vmatprep.subr.mxu0 0.0
    %758 = vmatpush1.msra.mxu0 0.0
    %759 = vmatprep.subr.mxu0 0.0
    %760 = vmatpush1.msra.mxu0 0.0
    %761 = vmatprep.subr.mxu0 0.0
    %762 = vmatpush1.msra.mxu0 0.0
    %763 = vmatprep.subr.mxu0 0.0
    %764 = vmatpush1.msra.mxu0 0.0
    %765 = vmatprep.subr.mxu0 0.0
    %766 = vmatpush1.msra.mxu0 0.0
    %767 = vmatprep.subr.mxu0 0.0
    %768 = vmatpush1.msra.mxu0 0.0
    %769 = vmatprep.subr.mxu0 0.0
    %770 = vmatpush1.msra.mxu0 0.0
    %771 = vmatprep.subr.mxu0 0.0
    %772 = vmatpush1.msra.mxu0 0.0
    %773 = vmatprep.subr.mxu0 0.0
    %774 = vmatpush1.msra.mxu0 0.0
    %775 = vmatprep.subr.mxu0 0.0
    %776 = vmatpush1.msra.mxu0 0.0
    %777 = vmatprep.subr.mxu0 0.0
    %778 = vmatpush1.msra.mxu0 0.0
    %779 = vmatprep.subr.mxu0 0.0
    %780 = vmatpush1.msra.mxu0 0.0
    %781 = vmatprep.subr.mxu0 0.0
    %782 = vmatpush1.msra.mxu0 0.0
    %783 = vmatprep.subr.mxu0 0.0
    %784 = vmatpush1.msra.mxu0 0.0
    %785 = vmatprep.subr.mxu0 0.0
    %786 = vmatpush1.msra.mxu0 0.0
    %787 = vmatprep.subr.mxu0 0.0
    %788 = vmatpush1.msra.mxu0 0.0
    %789 = vmatprep.subr.mxu0 0.0
    %790 = vmatpush1.msra.mxu0 0.0
    %791 = vmatprep.mubr.f32.mxu0 0.0
    %792 = vmatmul.mubr.f32.gmra.mrb[0].mxu0 %v318
    %v793 = vpop.f32.mrb[0].mxu0
    %v794 = vadd.f32 0.0, %v793
    %v795 = vpop.f32.mrb[0].mxu0
    %796 = vmatprep.mubr.f32.mxu0 0.0
    %797 = vmatmul.mubr.f32.gmra.mrb[0].mxu0 %v321
    %v798 = vpop.f32.mrb[0].mxu0
    %v799 = vadd.f32 0.0, %v798
    %v800 = vpop.f32.mrb[0].mxu0
    %801 = vmatprep.mubr.f32.mxu0 0.0
    %802 = vmatmul.mubr.f32.gmra.mrb[0].mxu0 %v324
    %v803 = vpop.f32.mrb[0].mxu0
    %v804 = vadd.f32 0.0, %v803
    %v805 = vpop.f32.mrb[0].mxu0
    %806 = vmatprep.mubr.f32.mxu0 0.0
    %807 = vmatmul.mubr.f32.gmra.mrb[0].mxu0 %v327
    %v808 = vpop.f32.mrb[0].mxu0
    %v809 = vadd.f32 0.0, %v808
    %v810 = vpop.f32.mrb[0].mxu0
    %811 = vdwg.mxu0
    %v812 = vrot.slane %v724, 4
    %v813 = vadd.f32 %v724, %v812
    %v814 = vrot.slane %v813, 2
    %v815 = vadd.f32 %v813, %v814
    %v816 = vrot.slane %v815, 1
    %v817 = vadd.f32 %v815, %v816
    %818 = vmatprep.subr.mxu0 0.0
    %819 = vmatpush1.msra.mxu0 %v794
    %820 = vmatprep.subr.mxu0 0.0
    %821 = vmatpush1.msra.mxu0 %v799
    %822 = vmatprep.subr.mxu0 0.0
    %823 = vmatpush1.msra.mxu0 %v804
    %824 = vmatprep.subr.mxu0 0.0
    %825 = vmatpush1.msra.mxu0 %v809
    %826 = vmatprep.subr.mxu0 0.0
    %827 = vmatpush1.msra.mxu0 0.0
    %828 = vmatprep.subr.mxu0 0.0
    %829 = vmatpush1.msra.mxu0 0.0
    %830 = vmatprep.subr.mxu0 0.0
    %831 = vmatpush1.msra.mxu0 0.0
    %832 = vmatprep.subr.mxu0 0.0
    %833 = vmatpush1.msra.mxu0 0.0
    %834 = vmatprep.subr.mxu0 0.0
    %835 = vmatpush1.msra.mxu0 0.0
    %836 = vmatprep.subr.mxu0 0.0
    %837 = vmatpush1.msra.mxu0 0.0
    %838 = vmatprep.subr.mxu0 0.0
    %839 = vmatpush1.msra.mxu0 0.0
    %840 = vmatprep.subr.mxu0 0.0
    %841 = vmatpush1.msra.mxu0 0.0
    %842 = vmatprep.subr.mxu0 0.0
    %843 = vmatpush1.msra.mxu0 0.0
    %844 = vmatprep.subr.mxu0 0.0
    %845 = vmatpush1.msra.mxu0 0.0
    %846 = vmatprep.subr.mxu0 0.0
    %847 = vmatpush1.msra.mxu0 0.0
    %848 = vmatprep.subr.mxu0 0.0
    %849 = vmatpush1.msra.mxu0 0.0
    %850 = vmatprep.subr.mxu0 0.0
    %851 = vmatpush1.msra.mxu0 0.0
    %852 = vmatprep.subr.mxu0 0.0
    %853 = vmatpush1.msra.mxu0 0.0
    %854 = vmatprep.subr.mxu0 0.0
    %855 = vmatpush1.msra.mxu0 0.0
    %856 = vmatprep.subr.mxu0 0.0
    %857 = vmatpush1.msra.mxu0 0.0
    %858 = vmatprep.subr.mxu0 0.0
    %859 = vmatpush1.msra.mxu0 0.0
    %860 = vmatprep.subr.mxu0 0.0
    %861 = vmatpush1.msra.mxu0 0.0
    %862 = vmatprep.subr.mxu0 0.0
    %863 = vmatpush1.msra.mxu0 0.0
    %864 = vmatprep.subr.mxu0 0.0
    %865 = vmatpush1.msra.mxu0 0.0
    %866 = vmatprep.subr.mxu0 0.0
    %867 = vmatpush1.msra.mxu0 0.0
    %868 = vmatprep.subr.mxu0 0.0
    %869 = vmatpush1.msra.mxu0 0.0
    %870 = vmatprep.subr.mxu0 0.0
    %871 = vmatpush1.msra.mxu0 0.0
    %872 = vmatprep.subr.mxu0 0.0
    %873 = vmatpush1.msra.mxu0 0.0
    %874 = vmatprep.subr.mxu0 0.0
    %875 = vmatpush1.msra.mxu0 0.0
    %876 = vmatprep.subr.mxu0 0.0
    %877 = vmatpush1.msra.mxu0 0.0
    %878 = vmatprep.subr.mxu0 0.0
    %879 = vmatpush1.msra.mxu0 0.0
    %880 = vmatprep.subr.mxu0 0.0
    %881 = vmatpush1.msra.mxu0 0.0
    %882 = vmatprep.mubr.f32.mxu0 0.0
    %883 = vmatmul.mubr.f32.gmra.mrb[0].mxu0 %v421
    %v884 = vpop.f32.mrb[0].mxu0
    %v885 = vadd.f32 %v817, %v884
    %v886 = vpop.f32.mrb[0].mxu0
    %887 = vdwg.mxu0
    %888 = vmatprep.subr.mxu0 0.0
    %889 = vmatpush1.msra.mxu0 %v126
    %890 = vmatprep.subr.mxu0 0.0
    %891 = vmatpush1.msra.mxu0 %v127
    %892 = vmatprep.subr.mxu0 0.0
    %893 = vmatpush1.msra.mxu0 %v128
    %894 = vmatprep.subr.mxu0 0.0
    %895 = vmatpush1.msra.mxu0 %v129
    %896 = vmatprep.subr.mxu0 0.0
    %897 = vmatpush1.msra.mxu0 0.0
    %898 = vmatprep.subr.mxu0 0.0
    %899 = vmatpush1.msra.mxu0 0.0
    %900 = vmatprep.subr.mxu0 0.0
    %901 = vmatpush1.msra.mxu0 0.0
    %902 = vmatprep.subr.mxu0 0.0
    %903 = vmatpush1.msra.mxu0 0.0
    %904 = vmatprep.subr.mxu0 0.0
    %905 = vmatpush1.msra.mxu0 0.0
    %906 = vmatprep.subr.mxu0 0.0
    %907 = vmatpush1.msra.mxu0 0.0
    %908 = vmatprep.subr.mxu0 0.0
    %909 = vmatpush1.msra.mxu0 0.0
    %910 = vmatprep.subr.mxu0 0.0
    %911 = vmatpush1.msra.mxu0 0.0
    %912 = vmatprep.subr.mxu0 0.0
    %913 = vmatpush1.msra.mxu0 0.0
    %914 = vmatprep.subr.mxu0 0.0
    %915 = vmatpush1.msra.mxu0 0.0
    %916 = vmatprep.subr.mxu0 0.0
    %917 = vmatpush1.msra.mxu0 0.0
    %918 = vmatprep.subr.mxu0 0.0
    %919 = vmatpush1.msra.mxu0 0.0
    %920 = vmatprep.subr.mxu0 0.0
    %921 = vmatpush1.msra.mxu0 0.0
    %922 = vmatprep.subr.mxu0 0.0
    %923 = vmatpush1.msra.mxu0 0.0
    %924 = vmatprep.subr.mxu0 0.0
    %925 = vmatpush1.msra.mxu0 0.0
    %926 = vmatprep.subr.mxu0 0.0
    %927 = vmatpush1.msra.mxu0 0.0
    %928 = vmatprep.subr.mxu0 0.0
    %929 = vmatpush1.msra.mxu0 0.0
    %930 = vmatprep.subr.mxu0 0.0
    %931 = vmatpush1.msra.mxu0 0.0
    %932 = vmatprep.subr.mxu0 0.0
    %933 = vmatpush1.msra.mxu0 0.0
    %934 = vmatprep.subr.mxu0 0.0
    %935 = vmatpush1.msra.mxu0 0.0
    %936 = vmatprep.subr.mxu0 0.0
    %937 = vmatpush1.msra.mxu0 0.0
    %938 = vmatprep.subr.mxu0 0.0
    %939 = vmatpush1.msra.mxu0 0.0
    %940 = vmatprep.subr.mxu0 0.0
    %941 = vmatpush1.msra.mxu0 0.0
    %942 = vmatprep.subr.mxu0 0.0
    %943 = vmatpush1.msra.mxu0 0.0
    %944 = vmatprep.subr.mxu0 0.0
    %945 = vmatpush1.msra.mxu0 0.0
    %946 = vmatprep.subr.mxu0 0.0
    %947 = vmatpush1.msra.mxu0 0.0
    %948 = vmatprep.subr.mxu0 0.0
    %949 = vmatpush1.msra.mxu0 0.0
    %950 = vmatprep.subr.mxu0 0.0
    %951 = vmatpush1.msra.mxu0 0.0
    %952 = vmatprep.mubr.f32.mxu0 0.0
    %953 = vmatmul.mubr.f32.gmra.mrb[0].mxu0 %v138
    %v954 = vpop.f32.mrb[0].mxu0
    %v955 = vadd.f32 %v885, %v954
    %v956 = vpop.f32.mrb[0].mxu0
    %957 = vdwg.mxu0
    %v958 = vmul.f32 %v955, 0.5
    %959 = vst [vmem:[#allocation13] sm:$0xff] %v958
    // Predicated region
    $region50: #{tpu_custom_call.1} parent=1 // pred_check
      _
    $region51: #{tpu_custom_call.1} parent=1 // pred_check_branch
      %961 = sbr.rel (0) target = $region53
    $region52: #{tpu_custom_call.1} parent=1 // pred_region
      %s963 = ssub.s32 128, 128
      %964 = vsyncadd [#allocation4], %s963
      %s966 = sshll.u32 [#allocation13], 4
      %s967 = int_to_ptr.vmem [resolvable:$true] %s966
      %969 = dma.vmem_to_hbm [thread:$0]  %s967, 128, %s6, [#allocation4]
    $region53: #{tpu_custom_call.1} parent=1 // pred_fallthru
      _
    // Predicated region
    $region54: #{tpu_custom_call.1} parent=1 // pred_check
      _
    $region55: #{tpu_custom_call.1} parent=1 // pred_check_branch
      %971 = sbr.rel (0) target = $region57
    $region56: #{tpu_custom_call.1} parent=1 // pred_region
      %972 = dma.done [#allocation4], 128
    $region57: #{tpu_custom_call.1} parent=1 // pred_fallthru
      _
    %973 = vsyncpa [#allocation3], 1
    %974 = vsyncpa [#allocation6], 1
    %975 = vsyncpa [#allocation9], 1
    %976 = vsyncpa [#allocation12], 1
    %977 = vsyncpa [#allocation4], 1

</llo_original>
